<compile_context>
chip_gen: v6e
topology: v6e:2x2x1
jax: 0.10.0
libtpu: 0.0.40
codegen_flags: <defaults>
</compile_context>

<pallas_src>
import jax
import jax.numpy as jnp
from jax import lax
from jax.experimental import pallas as pl
from jax.experimental.pallas import tpu as pltpu

LANES = 128                # TPU lane width
IN_F, HID, OUT_F = 2, 100, 2
IN_PAD = 8                 # x streamed as (B_pad, 8): lanes 0..1 real, rest zero
OUT_PAD = 8                # transposed output slab rows: rows 0..1 real, rest zero


def _mlp_kernel(x_ref, w1_ref, w23_ref, b12_ref, b3_ref, o_ref):
    # x_ref:   (TB, 8)        bf16   input features in lanes 0..1 (pad lanes zero)
    # w1_ref:  (8, 128)       bf16   rows 0..1 = W1 rows (in -> hidden)
    # w23_ref: (2, 128, 128)  bf16   [0] = W2, [1] = W3^T (out x in)
    # b12_ref: (2, 1, 128)    f32    b1, b2
    # b3_ref:  (128, 1)       f32    b3 laid out along sublanes (matches out_t)
    # o_ref:   (8, TB)        f32    transposed output, rows 0..1 = logits
    x = x_ref[...].astype(jnp.float32)           # (TB, 8)
    w1 = w1_ref[...].astype(jnp.float32)         # (8, 128)

    # Layer 1 on the VPU: only 2 real input features -> 2 broadcast multiply-adds.
    h = x[:, 0:1] * w1[0:1, :] + x[:, 1:2] * w1[1:2, :] + b12_ref[0]
    h = jnp.maximum(h, 0.0)                      # (TB, 128) f32

    # Layer 2 on the MXU (bf16 operands, f32 accumulate).
    h = jnp.dot(h.astype(jnp.bfloat16), w23_ref[0],
                preferred_element_type=jnp.float32) + b12_ref[1]
    h = jnp.maximum(h, 0.0)                      # (TB, 128) f32

    # Layer 3, computed directly transposed on the MXU (A @ B^T):
    #   out_t[o, b] = sum_k W3^T[o, k] * h[b, k]
    out_t = lax.dot_general(
        w23_ref[1], h.astype(jnp.bfloat16),
        dimension_numbers=(((1,), (1,)), ((), ())),
        preferred_element_type=jnp.float32)      # (128, TB)
    out_t = out_t + b3_ref[...]                  # bias broadcast over batch lanes

    o_ref[...] = out_t[:OUT_PAD, :].astype(o_ref.dtype)


def _round_up(n, m):
    return ((n + m - 1) // m) * m


def simple_nn_forward(x, params, *, max_tb=512):
    """Fused forward pass of SimpleNN. x: (B, 2) float. Returns (B, 2) f32."""
    w1p, w23, b12, b3t = params
    B, f_in = x.shape
    assert f_in == IN_F, f_in

    # Batch tiling: if the padded batch exceeds 128 rows, pick a tile that is a
    # multiple of 128 (lane-dense transposed-output stores) and yields >= 2 grid
    # steps (v7x megacore), capped at max_tb. Otherwise a single full-extent block.
    b_pad0 = _round_up(max(B, 8), 8)
    if b_pad0 <= LANES:
        tb = b_pad0
    else:
        tb = min(max_tb, _round_up((b_pad0 + 1) // 2, LANES))
    b_pad = _round_up(b_pad0, tb)
    grid = (b_pad // tb,)

    # Narrow bf16 input slab; pad rows / lanes must be exactly zero.
    x_p = jnp.zeros((b_pad, IN_PAD), jnp.bfloat16)
    x_p = x_p.at[:B, :IN_F].set(x.astype(jnp.bfloat16))

    flops = 2 * b_pad * LANES * LANES * 2 + 6 * b_pad * LANES
    bytes_accessed = (x_p.size * 2 + OUT_PAD * b_pad * 4
                      + (w1p.size + w23.size) * 2 + (b12.size + b3t.size) * 4)

    out_t = pl.pallas_call(
        _mlp_kernel,
        out_shape=jax.ShapeDtypeStruct((OUT_PAD, b_pad), jnp.float32),
        grid=grid,
        in_specs=[
            pl.BlockSpec((tb, IN_PAD), lambda i: (i, 0)),           # x tile per step
            pl.BlockSpec((IN_PAD, LANES), lambda i: (0, 0)),        # W1 rows, resident
            pl.BlockSpec((2, LANES, LANES), lambda i: (0, 0, 0)),   # W2 / W3^T, resident
            pl.BlockSpec((2, 1, LANES), lambda i: (0, 0, 0)),       # b1, b2, resident
            pl.BlockSpec((LANES, 1), lambda i: (0, 0)),             # b3 (sublane layout)
        ],
        out_specs=pl.BlockSpec((OUT_PAD, tb), lambda i: (0, i)),    # transposed logits
        compiler_params=pltpu.CompilerParams(
            dimension_semantics=("parallel",),      # batch axis -> both TCs on v7x
            vmem_limit_bytes=32 * 1024 * 1024,
        ),
        cost_estimate=pl.CostEstimate(
            flops=flops, transcendentals=0, bytes_accessed=bytes_accessed),
    )(x_p, w1p, w23, b12, b3t)

    # Rows 0..1 of the narrow transposed slab are the real logits.
    return out_t[:OUT_F, :B].T


def init_params(key):
    """PyTorch nn.Linear-style uniform init, packed into zero-padded TPU slabs.

    Returns (packed_params, raw_params): packed feed the kernel, raw (f32, unpadded)
    feed the pure-JAX reference.
    """
    def linear(key, fan_in, fan_out):
        kw, kb = jax.random.split(key)
        bound = 1.0 / jnp.sqrt(jnp.float32(fan_in))
        w = jax.random.uniform(kw, (fan_in, fan_out), jnp.float32, -bound, bound)
        b = jax.random.uniform(kb, (fan_out,), jnp.float32, -bound, bound)
        return w, b

    k1, k2, k3 = jax.random.split(key, 3)
    w1, b1 = linear(k1, IN_F, HID)      # (2, 100)
    w2, b2 = linear(k2, HID, HID)       # (100, 100)
    w3, b3 = linear(k3, HID, OUT_F)     # (100, 2)

    # All padding exactly zero: ReLU(0 + 0) = 0 keeps pad lanes inert in every layer.
    w1p = jnp.zeros((IN_PAD, LANES), jnp.bfloat16)
    w1p = w1p.at[:IN_F, :HID].set(w1.astype(jnp.bfloat16))

    w23 = jnp.zeros((2, LANES, LANES), jnp.bfloat16)
    w23 = w23.at[0, :HID, :HID].set(w2.astype(jnp.bfloat16))
    w23 = w23.at[1, :OUT_F, :HID].set(w3.T.astype(jnp.bfloat16))   # stored transposed

    b12 = jnp.zeros((2, 1, LANES), jnp.float32)
    b12 = b12.at[0, 0, :HID].set(b1)
    b12 = b12.at[1, 0, :HID].set(b2)

    b3t = jnp.zeros((LANES, 1), jnp.float32)
    b3t = b3t.at[:OUT_F, 0].set(b3)

    packed = (w1p, w23, b12, b3t)
    raw = (w1, b1, w2, b2, w3, b3)
    return packed, raw


def reference_forward(x, raw_params):
    """Pure-JAX f32 reference on the unpadded logical shapes."""
    w1, b1, w2, b2, w3, b3 = raw_params
    h1 = jnp.maximum(x @ w1 + b1, 0.0)
    h2 = jnp.maximum(h1 @ w2 + b2, 0.0)
    return h2 @ w3 + b3


if __name__ == "__main__":
    key = jax.random.PRNGKey(0)
    kp, kx = jax.random.split(key)

    packed, raw = init_params(kp)
    x = jax.random.normal(kx, (8, IN_F), jnp.float32)   # batch=8, in_features=2

    out = simple_nn_forward(x, packed)
    out = jax.block_until_ready(out)

    ref = reference_forward(x, raw)
    assert out.shape == (8, OUT_F), out.shape
    # bf16 weight/activation streaming -> loosened tolerance vs the f32 reference.
    err = float(jnp.max(jnp.abs(out - ref)))
    assert jnp.allclose(out, ref, atol=2e-2, rtol=2e-2), f"mismatch vs reference: {err}"

    print("KERNEL_OK")
</pallas_src>

<mosaic_0001>
module attributes {stable_mosaic.version = 11 : i64} {
  func.func @_mlp_kernel(%arg0: i32, %arg1: memref<8x8xbf16, #tpu.memory_space<vmem>>, %arg2: memref<8x128xbf16, #tpu.memory_space<vmem>>, %arg3: memref<2x128x128xbf16, #tpu.memory_space<vmem>>, %arg4: memref<2x1x128xf32, #tpu.memory_space<vmem>>, %arg5: memref<128x1xf32, #tpu.memory_space<vmem>>, %arg6: memref<8x8xf32, #tpu.memory_space<vmem>>) attributes {dimension_semantics = [#tpu.dimension_semantics<parallel>], iteration_bounds = array<i64: 1>, scalar_prefetch = 0 : i64, scratch_operands = 0 : i64, tpu.core_type = #tpu.core_type<tc>, window_params = [{transform_indices = @transform_0, window_bounds = array<i64: 8, 8>}, {pipeline_mode = #tpu.pipeline_mode<synchronous>, transform_indices = @transform_1, window_bounds = array<i64: 8, 128>}, {pipeline_mode = #tpu.pipeline_mode<synchronous>, transform_indices = @transform_2, window_bounds = array<i64: 2, 128, 128>}, {pipeline_mode = #tpu.pipeline_mode<synchronous>, transform_indices = @transform_3, window_bounds = array<i64: 2, 1, 128>}, {pipeline_mode = #tpu.pipeline_mode<synchronous>, transform_indices = @transform_4, window_bounds = array<i64: 128, 1>}, {transform_indices = @transform_5, window_bounds = array<i64: 8, 8>}]} {
    %c0 = arith.constant 0 : index
    %c0_0 = arith.constant 0 : index
    %0 = vector.load %arg1[%c0, %c0_0] : memref<8x8xbf16, #tpu.memory_space<vmem>>, vector<8x8xbf16>
    %1 = arith.extf %0 : vector<8x8xbf16> to vector<8x8xf32>
    %c0_1 = arith.constant 0 : index
    %c0_2 = arith.constant 0 : index
    %2 = vector.load %arg2[%c0_1, %c0_2] : memref<8x128xbf16, #tpu.memory_space<vmem>>, vector<8x128xbf16>
    %3 = arith.extf %2 : vector<8x128xbf16> to vector<8x128xf32>
    %4 = vector.extract_strided_slice %1 {offsets = [0, 0], sizes = [8, 1], strides = [1, 1]} : vector<8x8xf32> to vector<8x1xf32>
    %5 = vector.extract_strided_slice %3 {offsets = [0, 0], sizes = [1, 128], strides = [1, 1]} : vector<8x128xf32> to vector<1x128xf32>
    %6 = vector.broadcast %4 : vector<8x1xf32> to vector<8x128xf32>
    %7 = vector.broadcast %5 : vector<1x128xf32> to vector<8x128xf32>
    %8 = arith.mulf %6, %7 : vector<8x128xf32>
    %9 = vector.extract_strided_slice %1 {offsets = [0, 1], sizes = [8, 1], strides = [1, 1]} : vector<8x8xf32> to vector<8x1xf32>
    %10 = vector.extract_strided_slice %3 {offsets = [1, 0], sizes = [1, 128], strides = [1, 1]} : vector<8x128xf32> to vector<1x128xf32>
    %11 = vector.broadcast %9 : vector<8x1xf32> to vector<8x128xf32>
    %12 = vector.broadcast %10 : vector<1x128xf32> to vector<8x128xf32>
    %13 = arith.mulf %11, %12 : vector<8x128xf32>
    %14 = arith.addf %8, %13 : vector<8x128xf32>
    %c0_3 = arith.constant 0 : index
    %c0_4 = arith.constant 0 : index
    %c0_5 = arith.constant 0 : index
    %15 = vector.load %arg4[%c0_3, %c0_4, %c0_5] : memref<2x1x128xf32, #tpu.memory_space<vmem>>, vector<1x1x128xf32>
    %16 = vector.shape_cast %15 : vector<1x1x128xf32> to vector<1x128xf32>
    %17 = vector.broadcast %16 : vector<1x128xf32> to vector<8x128xf32>
    %18 = arith.addf %14, %17 : vector<8x128xf32>
    %cst = arith.constant 0.000000e+00 : f32
    %19 = vector.broadcast %cst : f32 to vector<8x128xf32>
    %20 = arith.maximumf %18, %19 : vector<8x128xf32>
    %21 = arith.truncf %20 : vector<8x128xf32> to vector<8x128xbf16>
    %c0_6 = arith.constant 0 : index
    %c0_7 = arith.constant 0 : index
    %c0_8 = arith.constant 0 : index
    %22 = vector.load %arg3[%c0_6, %c0_7, %c0_8] : memref<2x128x128xbf16, #tpu.memory_space<vmem>>, vector<1x128x128xbf16>
    %23 = vector.shape_cast %22 : vector<1x128x128xbf16> to vector<128x128xbf16>
    %cst_9 = arith.constant dense<0.000000e+00> : vector<8x128xf32>
    %24 = tpu.matmul %21, %23, %cst_9 {dimension_numbers = #tpu.dot_dimension_numbers<[1], [0], [0], [1], [0, 0, 1, 1], [], []>} : vector<8x128xbf16>, vector<128x128xbf16>, vector<8x128xf32> -> vector<8x128xf32>
    %c1 = arith.constant 1 : index
    %c0_10 = arith.constant 0 : index
    %c0_11 = arith.constant 0 : index
    %25 = vector.load %arg4[%c1, %c0_10, %c0_11] : memref<2x1x128xf32, #tpu.memory_space<vmem>>, vector<1x1x128xf32>
    %26 = vector.shape_cast %25 : vector<1x1x128xf32> to vector<1x128xf32>
    %27 = vector.broadcast %26 : vector<1x128xf32> to vector<8x128xf32>
    %28 = arith.addf %24, %27 : vector<8x128xf32>
    %cst_12 = arith.constant 0.000000e+00 : f32
    %29 = vector.broadcast %cst_12 : f32 to vector<8x128xf32>
    %30 = arith.maximumf %28, %29 : vector<8x128xf32>
    %c1_13 = arith.constant 1 : index
    %c0_14 = arith.constant 0 : index
    %c0_15 = arith.constant 0 : index
    %31 = vector.load %arg3[%c1_13, %c0_14, %c0_15] : memref<2x128x128xbf16, #tpu.memory_space<vmem>>, vector<1x128x128xbf16>
    %32 = vector.shape_cast %31 : vector<1x128x128xbf16> to vector<128x128xbf16>
    %33 = arith.truncf %30 : vector<8x128xf32> to vector<8x128xbf16>
    %cst_16 = arith.constant dense<0.000000e+00> : vector<128x8xf32>
    %34 = tpu.matmul %32, %33, %cst_16 {dimension_numbers = #tpu.dot_dimension_numbers<[1], [1], [0], [0], [0, 0, 1, 0], [], []>} : vector<128x128xbf16>, vector<8x128xbf16>, vector<128x8xf32> -> vector<128x8xf32>
    %c0_17 = arith.constant 0 : index
    %c0_18 = arith.constant 0 : index
    %35 = vector.load %arg5[%c0_17, %c0_18] : memref<128x1xf32, #tpu.memory_space<vmem>>, vector<128x1xf32>
    %36 = vector.broadcast %35 : vector<128x1xf32> to vector<128x8xf32>
    %37 = arith.addf %34, %36 : vector<128x8xf32>
    %38 = vector.extract_strided_slice %37 {offsets = [0, 0], sizes = [8, 8], strides = [1, 1]} : vector<128x8xf32> to vector<8x8xf32>
    %c0_19 = arith.constant 0 : index
    %c0_20 = arith.constant 0 : index
    %39 = vector.load %arg6[%c0_19, %c0_20] : memref<8x8xf32, #tpu.memory_space<vmem>>, vector<8x8xf32>
    tpu.vector_store %arg6[%c0_19, %c0_20], %38 {strides = array<i32>} : memref<8x8xf32, #tpu.memory_space<vmem>>, vector<8x8xf32>,
    return
  }
  func.func @transform_0(%arg0: i32) -> (i32, i32) {
    %c0_i32 = arith.constant 0 : i32
    %c0_i32_0 = arith.constant 0 : i32
    return %arg0, %c0_i32 : i32, i32
  }
  func.func @transform_1(%arg0: i32) -> (i32, i32) {
    %c0_i32 = arith.constant 0 : i32
    %c0_i32_0 = arith.constant 0 : i32
    %c0_i32_1 = arith.constant 0 : i32
    return %c0_i32, %c0_i32_0 : i32, i32
  }
  func.func @transform_2(%arg0: i32) -> (i32, i32, i32) {
    %c0_i32 = arith.constant 0 : i32
    %c0_i32_0 = arith.constant 0 : i32
    %c0_i32_1 = arith.constant 0 : i32
    %c0_i32_2 = arith.constant 0 : i32
    return %c0_i32, %c0_i32_0, %c0_i32_1 : i32, i32, i32
  }
  func.func @transform_3(%arg0: i32) -> (i32, i32, i32) {
    %c0_i32 = arith.constant 0 : i32
    %c0_i32_0 = arith.constant 0 : i32
    %c0_i32_1 = arith.constant 0 : i32
    %c0_i32_2 = arith.constant 0 : i32
    return %c0_i32, %c0_i32_0, %c0_i32_1 : i32, i32, i32
  }
  func.func @transform_4(%arg0: i32) -> (i32, i32) {
    %c0_i32 = arith.constant 0 : i32
    %c0_i32_0 = arith.constant 0 : i32
    %c0_i32_1 = arith.constant 0 : i32
    return %c0_i32, %c0_i32_0 : i32, i32
  }
  func.func @transform_5(%arg0: i32) -> (i32, i32) {
    %c0_i32 = arith.constant 0 : i32
    %c0_i32_0 = arith.constant 0 : i32
    return %c0_i32, %arg0 : i32, i32
  }
}

</mosaic_0001>

<llo_original>
// kernel: tpu_custom_call.1
$region0: #{tpu_custom_call.1}
  #allocation0 [shape = 'u32[]', space=smem, size = 0x4, offset = 0x4, fixed_abs, tag = 'smem constant byte address 0x4 - core index']
  #allocation1 [shape = 'u32[144,128]{1,0:T(1,128)}', space=vmem, size = 0x12000, scoped, tag = 'internal scratch']
  %s0 = inlined_call_operand.vmem [shape: bf16[8,8], index: 0, kind: input, shape index: {}]
  %s1 = inlined_call_operand.hbm [shape: bf16[8,128], index: 1, kind: input, shape index: {}]
  %s2 = inlined_call_operand.vmem [shape: bf16[2,128,128], index: 2, kind: input, shape index: {}]
  %s3 = inlined_call_operand.vmem [shape: f32[2,1,128], index: 3, kind: input, shape index: {}]
  %s4 = inlined_call_operand.vmem [shape: f32[128,1], index: 4, kind: input, shape index: {}]
  %s5 = inlined_call_operand.hbm [shape: f32[8,8], index: 5, kind: output, shape index: {}]
  %s6 = sld [smem:[#allocation0]]
  $region34: #{tpu_custom_call.1} parent=0
    _
  %s8 = ssub.s32 1, %s6
  %s9 = scalar_select 0, %s8, %s6
  $region1: #{tpu_custom_call.1} parent=0
    #allocation2 [shape = 'u8[2048]{0}', space=vmem, size = 0x800, scoped, tag = 'input window, operand 1, single buffered']
    #allocation3 [shape = 's32[1]{0}', space=sflag, size = 0x4, scoped, tag = 'scoped memory for tpu_custom_call.1']
    #allocation4 [shape = 's32[1]{0}', space=sflag, size = 0x4, scoped, tag = 'scoped memory for tpu_custom_call.1']
    #allocation5 [shape = 'u8[4096]{0}', space=vmem, size = 0x1000, scoped, tag = 'output window, operand 0, single buffered']
    %10 = vsyncpa [#allocation3], 0
    %11 = vsyncpa [#allocation4], 0
    // Predicated region
    $region2: #{tpu_custom_call.1} parent=1 // pred_check
      _
    $region3: #{tpu_custom_call.1} parent=1 // pred_check_branch
      %13 = sbr.rel (0) target = $region5
    $region4: #{tpu_custom_call.1} parent=1 // pred_region
      _
    $region5: #{tpu_custom_call.1} parent=1 // pred_fallthru
      _
    // Predicated region
    $region6: #{tpu_custom_call.1} parent=1 // pred_check
      _
    $region7: #{tpu_custom_call.1} parent=1 // pred_check_branch
      %15 = sbr.rel (0) target = $region9
    $region8: #{tpu_custom_call.1} parent=1 // pred_region
      %s17 = ssub.s32 64, 64
      %18 = vsyncadd [#allocation3], %s17
      %s20 = sshll.u32 [#allocation2], 4
      %s21 = int_to_ptr.vmem [resolvable:$true] %s20
      %23 = dma.hbm_to_vmem [thread:$0]  %s1, 64, %s21, [#allocation3]
    $region9: #{tpu_custom_call.1} parent=1 // pred_fallthru
      _
    // Predicated region
    $region10: #{tpu_custom_call.1} parent=1 // pred_check
      _
    $region11: #{tpu_custom_call.1} parent=1 // pred_check_branch
      %25 = sbr.rel (0) target = $region13
    $region12: #{tpu_custom_call.1} parent=1 // pred_region
      _
    $region13: #{tpu_custom_call.1} parent=1 // pred_fallthru
      _
    // Predicated region
    $region14: #{tpu_custom_call.1} parent=1 // pred_check
      _
    $region15: #{tpu_custom_call.1} parent=1 // pred_check_branch
      %27 = sbr.rel (0) target = $region17
    $region16: #{tpu_custom_call.1} parent=1 // pred_region
      _
    $region17: #{tpu_custom_call.1} parent=1 // pred_fallthru
      _
    // Predicated region
    $region18: #{tpu_custom_call.1} parent=1 // pred_check
      _
    $region19: #{tpu_custom_call.1} parent=1 // pred_check_branch
      %29 = sbr.rel (0) target = $region21
    $region20: #{tpu_custom_call.1} parent=1 // pred_region
      _
    $region21: #{tpu_custom_call.1} parent=1 // pred_fallthru
      _
    // Predicated region
    $region22: #{tpu_custom_call.1} parent=1 // pred_check
      _
    $region23: #{tpu_custom_call.1} parent=1 // pred_check_branch
      %31 = sbr.rel (0) target = $region25
    $region24: #{tpu_custom_call.1} parent=1 // pred_region
      %32 = dma.done [#allocation3], 64
    $region25: #{tpu_custom_call.1} parent=1 // pred_fallthru
      _
    %v34 = vld [vmem:[%s0] sm:$0xf]
    %v35 = vunpack.c.l.bf16 %v34
    %v36 = vld [vmem:[#allocation2] sm:$0xf]
    %v37 = vunpack.c.l.bf16 %v36
    %39 = vset.pattern.permute.xlu0 0
    %40 = vperm.xlu0 %39, %v35
    %v41 = vpop.permute.xlu0 %40
    %v43 = vlaneseq
    %v44 = vshrl.u32 %v43, 7
    %v45 = vsub.s32 0, %v44
    %v46 = vrot.slane %v37, %v45
    %v47 = vmul.f32 %v41, %v46
    %48 = vset.pattern.permute.xlu0 1
    %49 = vperm.xlu0 %48, %v35
    %v50 = vpop.permute.xlu0 %49
    %v52 = vlaneseq
    %v53 = vshrl.u32 %v52, 7
    %v54 = vsub.s32 1, %v53
    %v55 = vrot.slane %v37, %v54
    %v56 = vmul.f32 %v50, %v55
    %v57 = vadd.f32 %v47, %v56
    %v58 = vld [vmem:[%s3] sm:$0x1]
    %v60 = vlaneseq
    %v61 = vshrl.u32 %v60, 7
    %v62 = vsub.s32 0, %v61
    %v63 = vrot.slane %v58, %v62
    %v65 = vadd.f32 %v57, %v63
    %v66 = vmax.f32 %v65, 0.0
    %v67 = vpack.c.bf16 %v66, %v66
    %v68 = vld [vmem:[%s2] sm:$0xf]
    %v69 = vld [vmem:[%s2 + $0x4] sm:$0xf]
    %v70 = vld [vmem:[%s2 + $0x8] sm:$0xf]
    %v71 = vld [vmem:[%s2 + $0xc] sm:$0xf]
    %v72 = vld [vmem:[%s2 + $0x10] sm:$0xf]
    %v73 = vld [vmem:[%s2 + $0x14] sm:$0xf]
    %v74 = vld [vmem:[%s2 + $0x18] sm:$0xf]
    %v75 = vld [vmem:[%s2 + $0x1c] sm:$0xf]
    %v76 = vld [vmem:[%s2 + $0x20] sm:$0xf]
    %v77 = vld [vmem:[%s2 + $0x24] sm:$0xf]
    %v78 = vld [vmem:[%s2 + $0x28] sm:$0xf]
    %v79 = vld [vmem:[%s2 + $0x2c] sm:$0xf]
    %v80 = vld [vmem:[%s2 + $0x30] sm:$0xf]
    %v81 = vld [vmem:[%s2 + $0x34] sm:$0xf]
    %v82 = vld [vmem:[%s2 + $0x38] sm:$0xf]
    %v83 = vld [vmem:[%s2 + $0x3c] sm:$0xf]
    %s84 = scalar_lea.vmem %s3, 1
    %v85 = vld [vmem:[%s84] sm:$0x1]
    %v87 = vlaneseq
    %v88 = vshrl.u32 %v87, 7
    %v89 = vsub.s32 0, %v88
    %v90 = vrot.slane %v85, %v89
    %v108 = vunpack.c.l.b16 %v68
    %v109 = vunpack.c.l.b16 %v69
    %v110 = vunpack.c.l.b16 %v70
    %v111 = vunpack.c.l.b16 %v71
    %v112 = vunpack.c.l.b16 %v72
    %v113 = vunpack.c.l.b16 %v73
    %v114 = vunpack.c.l.b16 %v74
    %v115 = vunpack.c.l.b16 %v75
    %v116 = vunpack.c.l.b16 %v76
    %v117 = vunpack.c.l.b16 %v77
    %v118 = vunpack.c.l.b16 %v78
    %v119 = vunpack.c.l.b16 %v79
    %v120 = vunpack.c.l.b16 %v80
    %v121 = vunpack.c.l.b16 %v81
    %v122 = vunpack.c.l.b16 %v82
    %v123 = vunpack.c.l.b16 %v83
    %v124 = vpack.c.b16 %v109, %v108
    %v125 = vpack.c.b16 %v111, %v110
    %v126 = vpack.c.b16 %v113, %v112
    %v127 = vpack.c.b16 %v115, %v114
    %v128 = vpack.c.b16 %v117, %v116
    %v129 = vpack.c.b16 %v119, %v118
    %v130 = vpack.c.b16 %v121, %v120
    %v131 = vpack.c.b16 %v123, %v122
    %140 = vmatprep.subr.bf16.mxu0 0
    %141 = vmatpush1.bf16.msra.mxu0 %v131
    %142 = vmatprep.subr.bf16.mxu0 0
    %143 = vmatpush1.bf16.msra.mxu0 %v130
    %144 = vmatprep.subr.bf16.mxu0 0
    %145 = vmatpush1.bf16.msra.mxu0 %v129
    %146 = vmatprep.subr.bf16.mxu0 0
    %147 = vmatpush1.bf16.msra.mxu0 %v128
    %148 = vmatprep.subr.bf16.mxu0 0
    %149 = vmatpush1.bf16.msra.mxu0 %v127
    %150 = vmatprep.subr.bf16.mxu0 0
    %151 = vmatpush1.bf16.msra.mxu0 %v126
    %152 = vmatprep.subr.bf16.mxu0 0
    %153 = vmatpush1.bf16.msra.mxu0 %v125
    %154 = vmatprep.subr.bf16.mxu0 0
    %155 = vmatpush1.bf16.msra.mxu0 %v124
    %156 = vmatprep.subr.bf16.mxu0 0
    %157 = vmatpush2.bf16.msra.mxu0 0
    %158 = vmatprep.subr.bf16.mxu0 0
    %159 = vmatpush2.bf16.msra.mxu0 0
    %160 = vmatprep.subr.bf16.mxu0 0
    %161 = vmatpush2.bf16.msra.mxu0 0
    %162 = vmatprep.subr.bf16.mxu0 0
    %163 = vmatpush2.bf16.msra.mxu0 0
    %164 = vmatprep.subr.bf16.mxu0 0
    %165 = vmatpush2.bf16.msra.mxu0 0
    %166 = vmatprep.subr.bf16.mxu0 0
    %167 = vmatpush2.bf16.msra.mxu0 0
    %168 = vmatprep.subr.bf16.mxu0 0
    %169 = vmatpush2.bf16.msra.mxu0 0
    %170 = vmatprep.subr.bf16.mxu0 0
    %171 = vmatpush2.bf16.msra.mxu0 0
    %172 = vmatprep.mubr.bf16.mxu0 0
    %173 = vmatmul.mubr.bf16.gmra.mxu0 %v67
    %v174 = vpop.f32.mrf.mxu0
    %v175 = vadd.f32 %v90, %v174
    %v176 = vpop.f32.mrf.mxu0
    %v177 = vpop.f32.mrf.mxu0
    %v178 = vpop.f32.mrf.mxu0
    %179 = vdwg.mxu0
    %v180 = vmax.f32 %v175, 0.0
    %s181 = scalar_lea.vmem %s2, 64
    %v182 = vld [vmem:[%s181] sm:$0xf]
    %v183 = vld [vmem:[%s181 + $0x4] sm:$0xf]
    %v184 = vld [vmem:[%s181 + $0x8] sm:$0xf]
    %v185 = vld [vmem:[%s181 + $0xc] sm:$0xf]
    %v186 = vld [vmem:[%s181 + $0x10] sm:$0xf]
    %v187 = vld [vmem:[%s181 + $0x14] sm:$0xf]
    %v188 = vld [vmem:[%s181 + $0x18] sm:$0xf]
    %v189 = vld [vmem:[%s181 + $0x1c] sm:$0xf]
    %v190 = vld [vmem:[%s181 + $0x20] sm:$0xf]
    %v191 = vld [vmem:[%s181 + $0x24] sm:$0xf]
    %v192 = vld [vmem:[%s181 + $0x28] sm:$0xf]
    %v193 = vld [vmem:[%s181 + $0x2c] sm:$0xf]
    %v194 = vld [vmem:[%s181 + $0x30] sm:$0xf]
    %v195 = vld [vmem:[%s181 + $0x34] sm:$0xf]
    %v196 = vld [vmem:[%s181 + $0x38] sm:$0xf]
    %v197 = vld [vmem:[%s181 + $0x3c] sm:$0xf]
    %v198 = vpack.c.bf16 %v180, %v180
    %v199 = vld [vmem:[%s4] sm:$0xff]
    %v200 = vld [vmem:[%s4 + $0x8] sm:$0xff]
    %v201 = vld [vmem:[%s4 + $0x10] sm:$0xff]
    %v202 = vld [vmem:[%s4 + $0x18] sm:$0xff]
    %v203 = vld [vmem:[%s4 + $0x20] sm:$0xff]
    %v204 = vld [vmem:[%s4 + $0x28] sm:$0xff]
    %v205 = vld [vmem:[%s4 + $0x30] sm:$0xff]
    %v206 = vld [vmem:[%s4 + $0x38] sm:$0xff]
    %v207 = vld [vmem:[%s4 + $0x40] sm:$0xff]
    %v208 = vld [vmem:[%s4 + $0x48] sm:$0xff]
    %v209 = vld [vmem:[%s4 + $0x50] sm:$0xff]
    %v210 = vld [vmem:[%s4 + $0x58] sm:$0xff]
    %v211 = vld [vmem:[%s4 + $0x60] sm:$0xff]
    %v212 = vld [vmem:[%s4 + $0x68] sm:$0xff]
    %v213 = vld [vmem:[%s4 + $0x70] sm:$0xff]
    %v214 = vld [vmem:[%s4 + $0x78] sm:$0xff]
    %216 = vset.pattern.permute.xlu0 0
    %217 = vperm.xlu0 %216, %v199
    %v218 = vpop.permute.xlu0 %217
    %221 = vset.pattern.permute.xlu0 0
    %222 = vperm.xlu0 %221, %v200
    %v223 = vpop.permute.xlu0 %222
    %225 = vset.pattern.permute.xlu0 0
    %226 = vperm.xlu0 %225, %v201
    %v227 = vpop.permute.xlu0 %226
    %229 = vset.pattern.permute.xlu0 0
    %230 = vperm.xlu0 %229, %v202
    %v231 = vpop.permute.xlu0 %230
    %233 = vset.pattern.permute.xlu0 0
    %234 = vperm.xlu0 %233, %v203
    %v235 = vpop.permute.xlu0 %234
    %237 = vset.pattern.permute.xlu0 0
    %238 = vperm.xlu0 %237, %v204
    %v239 = vpop.permute.xlu0 %238
    %241 = vset.pattern.permute.xlu0 0
    %242 = vperm.xlu0 %241, %v205
    %v243 = vpop.permute.xlu0 %242
    %245 = vset.pattern.permute.xlu0 0
    %246 = vperm.xlu0 %245, %v206
    %v247 = vpop.permute.xlu0 %246
    %249 = vset.pattern.permute.xlu0 0
    %250 = vperm.xlu0 %249, %v207
    %v251 = vpop.permute.xlu0 %250
    %253 = vset.pattern.permute.xlu0 0
    %254 = vperm.xlu0 %253, %v208
    %v255 = vpop.permute.xlu0 %254
    %257 = vset.pattern.permute.xlu0 0
    %258 = vperm.xlu0 %257, %v209
    %v259 = vpop.permute.xlu0 %258
    %261 = vset.pattern.permute.xlu0 0
    %262 = vperm.xlu0 %261, %v210
    %v263 = vpop.permute.xlu0 %262
    %265 = vset.pattern.permute.xlu0 0
    %266 = vperm.xlu0 %265, %v211
    %v267 = vpop.permute.xlu0 %266
    %269 = vset.pattern.permute.xlu0 0
    %270 = vperm.xlu0 %269, %v212
    %v271 = vpop.permute.xlu0 %270
    %273 = vset.pattern.permute.xlu0 0
    %274 = vperm.xlu0 %273, %v213
    %v275 = vpop.permute.xlu0 %274
    %277 = vset.pattern.permute.xlu0 0
    %278 = vperm.xlu0 %277, %v214
    %v279 = vpop.permute.xlu0 %278
    %v296 = vunpack.c.l.b16 %v182
    %v297 = vunpack.c.l.b16 %v183
    %v298 = vunpack.c.l.b16 %v184
    %v299 = vunpack.c.l.b16 %v185
    %v300 = vunpack.c.l.b16 %v186
    %v301 = vunpack.c.l.b16 %v187
    %v302 = vunpack.c.l.b16 %v188
    %v303 = vunpack.c.l.b16 %v189
    %v304 = vunpack.c.l.b16 %v190
    %v305 = vunpack.c.l.b16 %v191
    %v306 = vunpack.c.l.b16 %v192
    %v307 = vunpack.c.l.b16 %v193
    %v308 = vunpack.c.l.b16 %v194
    %v309 = vunpack.c.l.b16 %v195
    %v310 = vunpack.c.l.b16 %v196
    %v311 = vunpack.c.l.b16 %v197
    %v312 = vpack.c.b16 %v297, %v296
    %v313 = vpack.c.b16 %v299, %v298
    %v314 = vpack.c.b16 %v301, %v300
    %v315 = vpack.c.b16 %v303, %v302
    %v316 = vpack.c.b16 %v305, %v304
    %v317 = vpack.c.b16 %v307, %v306
    %v318 = vpack.c.b16 %v309, %v308
    %v319 = vpack.c.b16 %v311, %v310
    %328 = vmatprep.subr.bf16.mxu0 0
    %329 = vmatpush1.bf16.xpose.msra.mxu0 0
    %330 = vmatprep.subr.bf16.mxu0 0
    %331 = vmatpush1.bf16.xpose.msra.mxu0 0
    %332 = vmatprep.subr.bf16.mxu0 0
    %333 = vmatpush1.bf16.xpose.msra.mxu0 0
    %334 = vmatprep.subr.bf16.mxu0 0
    %335 = vmatpush1.bf16.xpose.msra.mxu0 0
    %336 = vmatprep.subr.bf16.mxu0 0
    %337 = vmatpush1.bf16.xpose.msra.mxu0 0
    %338 = vmatprep.subr.bf16.mxu0 0
    %339 = vmatpush1.bf16.xpose.msra.mxu0 0
    %340 = vmatprep.subr.bf16.mxu0 0
    %341 = vmatpush1.bf16.xpose.msra.mxu0 0
    %342 = vmatprep.subr.bf16.mxu0 0
    %343 = vmatpush1.bf16.xpose.msra.mxu0 %v198
    %344 = vmatprep.subr.bf16.mxu0 0
    %345 = vmatpush2.bf16.xpose.msra.mxu0 0
    %346 = vmatprep.subr.bf16.mxu0 0
    %347 = vmatpush2.bf16.xpose.msra.mxu0 0
    %348 = vmatprep.subr.bf16.mxu0 0
    %349 = vmatpush2.bf16.xpose.msra.mxu0 0
    %350 = vmatprep.subr.bf16.mxu0 0
    %351 = vmatpush2.bf16.xpose.msra.mxu0 0
    %352 = vmatprep.subr.bf16.mxu0 0
    %353 = vmatpush2.bf16.xpose.msra.mxu0 0
    %354 = vmatprep.subr.bf16.mxu0 0
    %355 = vmatpush2.bf16.xpose.msra.mxu0 0
    %356 = vmatprep.subr.bf16.mxu0 0
    %357 = vmatpush2.bf16.xpose.msra.mxu0 0
    %358 = vmatprep.subr.bf16.mxu0 0
    %359 = vmatpush2.bf16.xpose.msra.mxu0 0
    %360 = vmatprep.mubr.bf16.mxu0 0
    %361 = vmatmul.mubr.bf16.gmra.mxu0 %v312
    %v362 = vpop.f32.mrf.mxu0
    %v363 = vadd.f32 %v218, %v362
    %v364 = vpop.f32.mrf.mxu0
    %v365 = vpop.f32.mrf.mxu0
    %v366 = vpop.f32.mrf.mxu0
    %367 = vmatprep.mubr.bf16.mxu0 0
    %368 = vmatmul.mubr.bf16.gmra.mxu0 %v313
    %v369 = vpop.f32.mrf.mxu0
    %v370 = vpop.f32.mrf.mxu0
    %v371 = vpop.f32.mrf.mxu0
    %v372 = vpop.f32.mrf.mxu0
    %373 = vmatprep.mubr.bf16.mxu0 0
    %374 = vmatmul.mubr.bf16.gmra.mxu0 %v314
    %v375 = vpop.f32.mrf.mxu0
    %v376 = vpop.f32.mrf.mxu0
    %v377 = vpop.f32.mrf.mxu0
    %v378 = vpop.f32.mrf.mxu0
    %379 = vmatprep.mubr.bf16.mxu0 0
    %380 = vmatmul.mubr.bf16.gmra.mxu0 %v315
    %v381 = vpop.f32.mrf.mxu0
    %v382 = vpop.f32.mrf.mxu0
    %v383 = vpop.f32.mrf.mxu0
    %v384 = vpop.f32.mrf.mxu0
    %385 = vmatprep.mubr.bf16.mxu0 0
    %386 = vmatmul.mubr.bf16.gmra.mxu0 %v316
    %v387 = vpop.f32.mrf.mxu0
    %v388 = vpop.f32.mrf.mxu0
    %v389 = vpop.f32.mrf.mxu0
    %v390 = vpop.f32.mrf.mxu0
    %391 = vmatprep.mubr.bf16.mxu0 0
    %392 = vmatmul.mubr.bf16.gmra.mxu0 %v317
    %v393 = vpop.f32.mrf.mxu0
    %v394 = vpop.f32.mrf.mxu0
    %v395 = vpop.f32.mrf.mxu0
    %v396 = vpop.f32.mrf.mxu0
    %397 = vmatprep.mubr.bf16.mxu0 0
    %398 = vmatmul.mubr.bf16.gmra.mxu0 %v318
    %v399 = vpop.f32.mrf.mxu0
    %v400 = vpop.f32.mrf.mxu0
    %v401 = vpop.f32.mrf.mxu0
    %v402 = vpop.f32.mrf.mxu0
    %403 = vmatprep.mubr.bf16.mxu0 0
    %404 = vmatmul.mubr.bf16.gmra.mxu0 %v319
    %v405 = vpop.f32.mrf.mxu0
    %v406 = vpop.f32.mrf.mxu0
    %v407 = vpop.f32.mrf.mxu0
    %v408 = vpop.f32.mrf.mxu0
    %409 = vdwg.mxu0
    %vm410 = vcmask 64512
    %411 = vst.msk [vmem:[#allocation5] sm:$0xff] %vm410, %v363
    // Predicated region
    $region26: #{tpu_custom_call.1} parent=1 // pred_check
      _
    $region27: #{tpu_custom_call.1} parent=1 // pred_check_branch
      %413 = sbr.rel (0) target = $region29
    $region28: #{tpu_custom_call.1} parent=1 // pred_region
      %s415 = ssub.s32 128, 128
      %416 = vsyncadd [#allocation4], %s415
      %s418 = sshll.u32 [#allocation5], 4
      %s419 = int_to_ptr.vmem [resolvable:$true] %s418
      %421 = dma.vmem_to_hbm [thread:$0]  %s419, 128, %s5, [#allocation4]
    $region29: #{tpu_custom_call.1} parent=1 // pred_fallthru
      _
    // Predicated region
    $region30: #{tpu_custom_call.1} parent=1 // pred_check
      _
    $region31: #{tpu_custom_call.1} parent=1 // pred_check_branch
      %423 = sbr.rel (0) target = $region33
    $region32: #{tpu_custom_call.1} parent=1 // pred_region
      %424 = dma.done [#allocation4], 128
    $region33: #{tpu_custom_call.1} parent=1 // pred_fallthru
      _
    %425 = vsyncpa [#allocation3], 1
    %426 = vsyncpa [#allocation4], 1

</llo_original>
